<compile_context>
chip_gen: v7x
topology: tpu7x:2x2x1
jax: 0.10.0
libtpu: 0.0.40
codegen_flags: <defaults>
</compile_context>

<pallas_src>
import functools

import jax
import jax.numpy as jnp
import numpy as np
from jax.experimental import pallas as pl
from jax.experimental.pallas import tpu as pltpu


def _round_up(a, b):
    return -(-a // b) * b


# ----------------------------------------------------------------------------
# Capability / direction probes (robust across JAX versions)
# ----------------------------------------------------------------------------
@functools.lru_cache(maxsize=None)
def _probe_features():
    """Returns (roll_matches_numpy, bf16_sublane_roll_ok, lane_concat_ok)."""
    def run_roll(dtype, rows, shift):
        def k(x_ref, o_ref):
            o_ref[...] = pltpu.roll(x_ref[...], shift, axis=0)
        x = (jnp.arange(rows * 128, dtype=jnp.float32)
             .reshape(rows, 128).astype(dtype))
        y = pl.pallas_call(
            k, out_shape=jax.ShapeDtypeStruct((rows, 128), dtype))(x)
        return (np.asarray(x.astype(jnp.float32)),
                np.asarray(y.astype(jnp.float32)))

    bf16_roll_ok = True
    shift = 3
    try:                                  # odd shift, non-vreg-aligned rows
        x, y = run_roll(jnp.bfloat16, 24, shift)
    except Exception:                     # fall back to f32 rolls in-kernel
        bf16_roll_ok = False
        shift = 1
        x, y = run_roll(jnp.float32, 8, shift)
    roll_matches_numpy = bool(y[shift, 0] == x[0, 0])

    try:                                  # bf16 lane-dim concatenation
        def kc(x_ref, o_ref):
            o_ref[...] = jnp.concatenate([x_ref[...], x_ref[...]], axis=1)
        xx = jnp.ones((24, 128), jnp.bfloat16)
        jax.block_until_ready(pl.pallas_call(
            kc, out_shape=jax.ShapeDtypeStruct((24, 256), jnp.bfloat16))(xx))
        lane_concat_ok = True
    except Exception:
        lane_concat_ok = False

    return roll_matches_numpy, bf16_roll_ok, lane_concat_ok


# ----------------------------------------------------------------------------
# Fused kernel: conv1(3x3,s)+bn1+relu -> conv2(3x3,1)+bn2 -> (+shortcut) -> relu
# ----------------------------------------------------------------------------
def _basic_block_kernel(xph_ref, mask_ref, w1_ref, b1_ref, w2_ref, b2_ref,
                        *rest, stride, wg, roll_like_np, bf16_roll_ok,
                        group_taps, has_downsample):
    """One batch element per grid step.

    xph_ref : (s*s, R, Cin_p) bf16   phase-decomposed, zero-padded, flattened
    mask_ref: (R, 1) f32             1.0 on valid (ho, wo) work-grid rows
    w1_ref  : (3, 3*Cin_p, Cp) bf16  conv1 taps grouped by kh, BN1 scale folded
    w2_ref  : (3, 3*Cp,  Cp)  bf16   conv2 taps grouped by kh, BN2 scale folded
    b*_ref  : (1, Cp) f32            folded BatchNorm biases
    [dw_ref : (Cin_p, Cp) bf16, db_ref : (1, Cp) f32]  1x1 shortcut (optional)
    o_ref   : (R, Cp) bf16           output on the (ho+2, wo+2) work grid
    """
    if has_downsample:
        dw_ref, db_ref, o_ref = rest
    else:
        (o_ref,) = rest
    r = o_ref.shape[0]
    f32 = jnp.float32

    def shifted(x, d):
        # y[q] = x[(q + d) % r]; wraparound rows land on zeroed / discarded
        # rows by construction of the padded work grid.
        d = d % r
        if d == 0:
            return x
        s = (r - d) if roll_like_np else d
        if bf16_roll_ok or x.dtype == f32:
            return pltpu.roll(x, s, axis=0)
        return pltpu.roll(x.astype(f32), s, axis=0).astype(x.dtype)

    def conv3x3(lhs_tap, w_ref):
        # Taps of each kernel row grouped along K (bf16 operands rolled, not
        # the f32 results); first group's matmul initializes the accumulator.
        acc = None
        for kh in range(3):
            taps = [lhs_tap(kh, kw) for kw in range(3)]
            if group_taps:
                parts = [jnp.dot(jnp.concatenate(taps, axis=1), w_ref[kh],
                                 preferred_element_type=f32)]
            else:
                ck = taps[0].shape[1]
                parts = [jnp.dot(taps[kw],
                                 w_ref[kh, kw * ck:(kw + 1) * ck, :],
                                 preferred_element_type=f32)
                         for kw in range(3)]
            for t in parts:
                acc = t if acc is None else acc + t
        return acc

    # ---- conv1 (3x3, stride) + bn1 (scale folded into w1) + relu ----------
    def tap1(kh, kw):
        p = (kh % stride) * stride + (kw % stride)
        d = (kh // stride) * wg + (kw // stride)
        return shifted(xph_ref[p], d)

    h = jnp.maximum(conv3x3(tap1, w1_ref) + b1_ref[...], 0.0)
    # Zero rows outside the valid (ho, wo) window: acts as conv2's zero
    # padding and kills garbage rows of the oversized work grid.
    g = (h * mask_ref[...]).astype(jnp.bfloat16)

    # ---- conv2 (3x3, stride 1, pad 1) + bn2 (scale folded into w2) --------
    def tap2(kh, kw):
        return shifted(g, (kh - 1) * wg + (kw - 1))

    y = conv3x3(tap2, w2_ref) + b2_ref[...]

    # ---- shortcut ----------------------------------------------------------
    a = 1 % stride
    p_res = a * stride + a
    d_res = ((1 - a) // stride) * (wg + 1)
    x_res = shifted(xph_ref[p_res], d_res)
    if has_downsample:          # 1x1 stride-s conv + bn (scale folded into dw)
        res = jnp.dot(x_res, dw_ref[...],
                      preferred_element_type=f32) + db_ref[...]
    else:                       # identity: no matmul, no scale/bias
        res = x_res.astype(f32)

    o_ref[...] = jnp.maximum(y + res, 0.0).astype(o_ref.dtype)


# ----------------------------------------------------------------------------
# Host-side packing helpers (cheap, one-time, ~1x the input bytes)
# ----------------------------------------------------------------------------
def _fold_bn(bn):
    gamma, beta, mean, var, eps = bn
    scale = gamma / jnp.sqrt(var + eps)
    bias = beta - mean * scale
    return scale.astype(jnp.float32), bias.astype(jnp.float32)


def _pad_bias(v, cp):
    return jnp.pad(v, (0, cp - v.shape[0])).reshape(1, cp).astype(jnp.float32)


def _pack_conv3x3(w_oihw, scale, cin_p, cp):
    """(Cout,Cin,3,3) -> (3, 3*cin_p, cp) bf16, grouped by kh; BN scale folded
    into the output channels in f32 before the bf16 cast."""
    cout, cin = w_oihw.shape[:2]
    w = w_oihw.astype(jnp.float32) * scale[:, None, None, None]
    w = jnp.transpose(w, (2, 3, 1, 0))                    # (kh, kw, Cin, Cout)
    w = jnp.pad(w, ((0, 0), (0, 0), (0, cin_p - cin), (0, cp - cout)))
    return w.reshape(3, 3 * cin_p, cp).astype(jnp.bfloat16)


def _pack_conv1x1(w_oihw, scale, cin_p, cp):
    cout, cin = w_oihw.shape[:2]
    w = w_oihw[:, :, 0, 0].astype(jnp.float32) * scale[:, None]
    w = jnp.transpose(w, (1, 0))
    return jnp.pad(w, ((0, cin_p - cin), (0, cp - cout))).astype(jnp.bfloat16)


def _phase_decompose(x_nhwc, stride, hg, wg):
    """(N,H,W,C) -> (N, s*s, Hg*Wg, C): phase (a, b), row i, col j holds
    zero-padded-input pixel (a + s*i, b + s*j) (top/left pad of 1)."""
    n, h, w, c = x_nhwc.shape
    xp = jnp.pad(x_nhwc, ((0, 0), (1, stride * hg - h - 1),
                          (1, stride * wg - w - 1), (0, 0)))
    phases = [xp[:, a::stride, b::stride, :]
              for a in range(stride) for b in range(stride)]
    ph = jnp.stack(phases, axis=1)                        # (N, s*s, Hg, Wg, C)
    return ph.reshape(n, stride * stride, hg * wg, c)


# ----------------------------------------------------------------------------
# Public forward pass
# ----------------------------------------------------------------------------
def basic_residual_block_forward(x_nchw, params):
    """Forward pass of BasicResidualBlock.  x: (N, Cin, H, W) float32 (NCHW)."""
    stride = int(params["stride"])
    cout, cin = params["w1"].shape[:2]
    has_downsample = "dw" in params

    x = jnp.transpose(x_nchw, (0, 2, 3, 1)).astype(jnp.float32)  # NCHW -> NHWC
    n, h, w, _ = x.shape
    ho = (h - 1) // stride + 1
    wo = (w - 1) // stride + 1
    hg, wg = ho + 2, wo + 2          # work grid == conv2's zero-padded grid
    r = hg * wg
    r8 = _round_up(r, 16)            # sublane-aligned (also for bf16 packing)
    cin_p = _round_up(cin, 128)      # K padded to 128 lanes -> lane-dense LHS
    cp = _round_up(cout, 128)        # lane-dense output channels
    ss = stride * stride
    if not has_downsample:
        assert cin_p == cp           # identity shortcut implies cin == cout

    xph = _phase_decompose(x, stride, hg, wg)
    xph = jnp.pad(xph, ((0, 0), (0, 0), (0, r8 - r), (0, cin_p - cin)))
    xph = xph.astype(jnp.bfloat16)

    # Valid-row mask of the work grid, precomputed on host (no in-kernel
    # iota / integer div); doubles as conv2's zero padding.
    q = np.arange(r8)
    mask = ((q // wg < ho) & (q % wg < wo) & (q < r)).astype(np.float32)
    mask = jnp.asarray(mask).reshape(r8, 1)

    s1, b1 = _fold_bn(params["bn1"])
    s2, b2 = _fold_bn(params["bn2"])
    w1p = _pack_conv3x3(params["w1"], s1, cin_p, cp)
    w2p = _pack_conv3x3(params["w2"], s2, cp, cp)
    b1 = _pad_bias(b1, cp)
    b2 = _pad_bias(b2, cp)

    vec_spec = pl.BlockSpec((1, cp), lambda i: (0, 0))
    args = [xph, mask, w1p, b1, w2p, b2]
    in_specs = [
        pl.BlockSpec((None, ss, r8, cin_p), lambda i: (i, 0, 0, 0)),
        pl.BlockSpec((r8, 1), lambda i: (0, 0)),
        pl.BlockSpec((3, 3 * cin_p, cp), lambda i: (0, 0, 0)),
        vec_spec,
        pl.BlockSpec((3, 3 * cp, cp), lambda i: (0, 0, 0)),
        vec_spec,
    ]
    if has_downsample:
        ds, db = _fold_bn(params["dbn"])
        dwp = _pack_conv1x1(params["dw"], ds, cin_p, cp)
        db = _pad_bias(db, cp)
        args += [dwp, db]
        in_specs += [pl.BlockSpec((cin_p, cp), lambda i: (0, 0)), vec_spec]

    roll_like_np, bf16_roll_ok, lane_concat_ok = _probe_features()
    kernel = functools.partial(
        _basic_block_kernel, stride=stride, wg=wg,
        roll_like_np=roll_like_np, bf16_roll_ok=bf16_roll_ok,
        group_taps=lane_concat_ok, has_downsample=has_downsample)

    # Advisory cost estimate (MXU flops of the 2 convs + optional 1x1).
    flops = int(2 * n * r8 * cp * (9 * cin_p + 9 * cp
                                   + (cin_p if has_downsample else 0)))
    bytes_accessed = int(
        xph.size * 2 + n * r8 * cp * 2
        + sum(int(a.size) * a.dtype.itemsize for a in args[1:]))

    # Per-step VMEM working set: double-buffered bf16 I/O + constants +
    # headroom for f32 accumulators and rolled/concatenated bf16 LHS tiles.
    wts_bytes = sum(int(a.size) * a.dtype.itemsize for a in args[1:])
    est = (2 * (ss * r8 * cin_p * 2 + r8 * cp * 2) + 2 * wts_bytes
           + r8 * cp * 4 * 8 + 2 * r8 * 3 * max(cin_p, cp) * 2)
    vmem_limit = int(min(max(est, 32 << 20), 48 << 20))   # 48 MiB: v7x-safe

    out = pl.pallas_call(
        kernel,
        out_shape=jax.ShapeDtypeStruct((n, r8, cp), jnp.bfloat16),
        grid=(n,),
        in_specs=in_specs,
        out_specs=pl.BlockSpec((None, r8, cp), lambda i: (i, 0, 0)),
        compiler_params=pltpu.CompilerParams(
            dimension_semantics=("parallel",),
            vmem_limit_bytes=vmem_limit),
        cost_estimate=pl.CostEstimate(flops=flops, transcendentals=0,
                                      bytes_accessed=bytes_accessed),
    )(*args)

    # For chained blocks one would keep this padded (r8, cp) bf16 layout;
    # here we unpack once to NCHW f32 to match the PyTorch module interface.
    out = out[:, :r, :cout].reshape(n, hg, wg, cout)[:, :ho, :wo, :]
    return jnp.transpose(out, (0, 3, 1, 2)).astype(jnp.float32)


# ----------------------------------------------------------------------------
# Deterministic synthetic parameters (PyTorch OIHW layout, eval-mode BN stats)
# ----------------------------------------------------------------------------
def _init_bn(key, c):
    k1, k2, k3, k4 = jax.random.split(key, 4)
    gamma = 1.0 + 0.1 * jax.random.normal(k1, (c,), jnp.float32)
    beta = 0.1 * jax.random.normal(k2, (c,), jnp.float32)
    mean = 0.1 * jax.random.normal(k3, (c,), jnp.float32)
    var = 1.0 + 0.5 * jax.random.uniform(k4, (c,), jnp.float32)
    return (gamma, beta, mean, var, 1e-5)


def init_basic_block(key, in_channels, out_channels, stride):
    ks = jax.random.split(key, 6)
    p = {
        "stride": int(stride),
        "w1": jax.random.normal(ks[0], (out_channels, in_channels, 3, 3),
                                jnp.float32) / (3.0 * in_channels ** 0.5),
        "bn1": _init_bn(ks[1], out_channels),
        "w2": jax.random.normal(ks[2], (out_channels, out_channels, 3, 3),
                                jnp.float32) / (3.0 * out_channels ** 0.5),
        "bn2": _init_bn(ks[3], out_channels),
    }
    if stride != 1 or in_channels != out_channels:
        p["dw"] = jax.random.normal(ks[4], (out_channels, in_channels, 1, 1),
                                    jnp.float32) / (in_channels ** 0.5)
        p["dbn"] = _init_bn(ks[5], out_channels)
    return p


def _reference_block(x_nchw, p):
    """Pure-JAX f32 reference with identical (eval-mode BN) semantics."""
    def conv(x, w_oihw, stride, pad):
        w = jnp.transpose(w_oihw, (2, 3, 1, 0))          # OIHW -> HWIO
        return jax.lax.conv_general_dilated(
            x, w, (stride, stride), [(pad, pad), (pad, pad)],
            dimension_numbers=("NHWC", "HWIO", "NHWC"))

    def bn(x, bnp):
        g, b, m, v, eps = bnp
        return (x - m) / jnp.sqrt(v + eps) * g + b

    s = int(p["stride"])
    x = jnp.transpose(x_nchw, (0, 2, 3, 1))
    res = bn(conv(x, p["dw"], s, 0), p["dbn"]) if "dw" in p else x
    h = jax.nn.relu(bn(conv(x, p["w1"], s, 1), p["bn1"]))
    h = bn(conv(h, p["w2"], 1, 1), p["bn2"])
    return jnp.transpose(jax.nn.relu(h + res), (0, 3, 1, 2))


# ----------------------------------------------------------------------------
if __name__ == "__main__":
    x = jax.random.normal(jax.random.PRNGKey(0), (2, 4, 16, 16), jnp.float32)

    # Downsample path: stride 2, 4 -> 8 channels (1x1-conv + BN shortcut).
    p_down = init_basic_block(jax.random.PRNGKey(1), 4, 8, stride=2)
    y_down = basic_residual_block_forward(x, p_down)
    jax.block_until_ready(y_down)
    assert y_down.shape == (2, 8, 8, 8)

    # Identity path: stride 1, 4 -> 4 channels.
    p_id = init_basic_block(jax.random.PRNGKey(2), 4, 4, stride=1)
    y_id = basic_residual_block_forward(x, p_id)
    jax.block_until_ready(y_id)
    assert y_id.shape == (2, 4, 16, 16)

    # Numerical check vs. pure-JAX reference (bf16 MXU operands / bf16 output
    # -> loose tolerance).
    np.testing.assert_allclose(np.asarray(y_down),
                               np.asarray(_reference_block(x, p_down)),
                               rtol=0.1, atol=0.1)
    np.testing.assert_allclose(np.asarray(y_id),
                               np.asarray(_reference_block(x, p_id)),
                               rtol=0.1, atol=0.1)

    print("KERNEL_OK")
</pallas_src>

<mosaic_0001>
module attributes {stable_mosaic.version = 11 : i64} {
  func.func @k(%arg0: memref<24x128xbf16, #tpu.memory_space<vmem>>, %arg1: memref<24x128xbf16, #tpu.memory_space<vmem>>) attributes {dimension_semantics = [], scalar_prefetch = 0 : i64, scratch_operands = 0 : i64, tpu.core_type = #tpu.core_type<tc>} {
    %c0 = arith.constant 0 : index
    %c0_0 = arith.constant 0 : index
    %0 = vector.load %arg0[%c0, %c0_0] : memref<24x128xbf16, #tpu.memory_space<vmem>>, vector<24x128xbf16>
    %c3_i32 = arith.constant 3 : i32
    %1 = tpu.dynamic_rotate %0 by %c3_i32 dim 0 : vector<24x128xbf16>, i32 -> vector<24x128xbf16>
    %c0_1 = arith.constant 0 : index
    %c0_2 = arith.constant 0 : index
    %2 = vector.load %arg1[%c0_1, %c0_2] : memref<24x128xbf16, #tpu.memory_space<vmem>>, vector<24x128xbf16>
    tpu.vector_store %arg1[%c0_1, %c0_2], %1 {strides = array<i32>} : memref<24x128xbf16, #tpu.memory_space<vmem>>, vector<24x128xbf16>,
    return
  }
}

module attributes {stable_mosaic.version = 11 : i64} {
  func.func @k(%arg0: memref<8x128xf32, #tpu.memory_space<vmem>>, %arg1: memref<8x128xf32, #tpu.memory_space<vmem>>) attributes {dimension_semantics = [], scalar_prefetch = 0 : i64, scratch_operands = 0 : i64, tpu.core_type = #tpu.core_type<tc>} {
    %c0 = arith.constant 0 : index
    %c0_0 = arith.constant 0 : index
    %0 = vector.load %arg0[%c0, %c0_0] : memref<8x128xf32, #tpu.memory_space<vmem>>, vector<8x128xf32>
    %c1_i32 = arith.constant 1 : i32
    %1 = tpu.dynamic_rotate %0 by %c1_i32 dim 0 : vector<8x128xf32>, i32 -> vector<8x128xf32>
    %c0_1 = arith.constant 0 : index
    %c0_2 = arith.constant 0 : index
    %2 = vector.load %arg1[%c0_1, %c0_2] : memref<8x128xf32, #tpu.memory_space<vmem>>, vector<8x128xf32>
    tpu.vector_store %arg1[%c0_1, %c0_2], %1 {strides = array<i32>} : memref<8x128xf32, #tpu.memory_space<vmem>>, vector<8x128xf32>,
    return
  }
}

</mosaic_0001>

<llo_original>
// kernel: tpu_custom_call.1
$region0: #{tpu_custom_call.1}
  #allocation0 [shape = 'u32[]', space=smem, size = 0x4, offset = 0x4, fixed_abs, tag = 'smem constant byte address 0x4 - core index']
  #allocation1 [shape = 'u32[144,128]{1,0:T(1,128)}', space=vmem, size = 0x12000, scoped, tag = 'internal scratch']
  %s0 = inlined_call_operand.hbm [shape: f32[8,128], index: 0, kind: input, shape index: {}]
  %s1 = inlined_call_operand.hbm [shape: f32[8,128], index: 1, kind: output, shape index: {}]
  %s2 = sld [smem:[#allocation0]]
  $region18: #{tpu_custom_call.1} parent=0
    _
  %s4 = ssub.s32 1, %s2
  %s5 = scalar_select 0, %s4, %s2
  $region1: #{tpu_custom_call.1} parent=0
    #allocation2 [shape = 'u8[4096]{0}', space=vmem, size = 0x1000, scoped, tag = 'input window, operand 0, single buffered']
    #allocation3 [shape = 's32[1]{0}', space=sflag, size = 0x4, scoped, tag = 'scoped memory for tpu_custom_call.1']
    #allocation4 [shape = 's32[1]{0}', space=sflag, size = 0x4, scoped, tag = 'scoped memory for tpu_custom_call.1']
    #allocation5 [shape = 'u8[4096]{0}', space=vmem, size = 0x1000, scoped, tag = 'output window, operand 0, single buffered']
    %6 = vsyncpa [#allocation3], 0
    %7 = vsyncpa [#allocation4], 0
    // Predicated region
    $region2: #{tpu_custom_call.1} parent=1 // pred_check
      _
    $region3: #{tpu_custom_call.1} parent=1 // pred_check_branch
      %9 = sbr.rel (0) target = $region5
    $region4: #{tpu_custom_call.1} parent=1 // pred_region
      %s11 = ssub.s32 128, 128
      %12 = vsyncadd [#allocation3], %s11
      %s14 = sshll.u32 [#allocation2], 4
      %s15 = int_to_ptr.vmem [resolvable:$true] %s14
      %17 = dma.hbm_to_vmem [thread:$0]  %s0, 128, %s15, [#allocation3]
    $region5: #{tpu_custom_call.1} parent=1 // pred_fallthru
      _
    // Predicated region
    $region6: #{tpu_custom_call.1} parent=1 // pred_check
      _
    $region7: #{tpu_custom_call.1} parent=1 // pred_check_branch
      %19 = sbr.rel (0) target = $region9
    $region8: #{tpu_custom_call.1} parent=1 // pred_region
      %20 = dma.done [#allocation3], 128
    $region9: #{tpu_custom_call.1} parent=1 // pred_fallthru
      _
    %v21 = vld [vmem:[#allocation2] sm:$0xff]
    %v22 = vrot.slane %v21, 7
    %23 = vst [vmem:[#allocation5] sm:$0xff] %v22
    // Predicated region
    $region10: #{tpu_custom_call.1} parent=1 // pred_check
      _
    $region11: #{tpu_custom_call.1} parent=1 // pred_check_branch
      %25 = sbr.rel (0) target = $region13
    $region12: #{tpu_custom_call.1} parent=1 // pred_region
      %s27 = ssub.s32 128, 128
      %28 = vsyncadd [#allocation4], %s27
      %s30 = sshll.u32 [#allocation5], 4
      %s31 = int_to_ptr.vmem [resolvable:$true] %s30
      %33 = dma.vmem_to_hbm [thread:$0]  %s31, 128, %s1, [#allocation4]
    $region13: #{tpu_custom_call.1} parent=1 // pred_fallthru
      _
    // Predicated region
    $region14: #{tpu_custom_call.1} parent=1 // pred_check
      _
    $region15: #{tpu_custom_call.1} parent=1 // pred_check_branch
      %35 = sbr.rel (0) target = $region17
    $region16: #{tpu_custom_call.1} parent=1 // pred_region
      %36 = dma.done [#allocation4], 128
    $region17: #{tpu_custom_call.1} parent=1 // pred_fallthru
      _
    %37 = vsyncpa [#allocation3], 1
    %38 = vsyncpa [#allocation4], 1

</llo_original>
